<compile_context>
chip_gen: v5e
topology: v5e:2x2
jax: 0.10.0
libtpu: 0.0.40
codegen_flags: <defaults>
</compile_context>

<pallas_src>
from functools import partial

import jax
import jax.numpy as jnp
from jax.experimental import pallas as pl
from jax.experimental.pallas import tpu as pltpu

TILE_B = 512  # lanes per grid step; multiple of 128 -> unmasked (lane-dense) stores


def policy_kernel(x_ref, w1_ref, b1_ref, w2_ref, b2_ref, w3_ref, b3_ref, o_ref):
    # x_ref: (4, TILE_B)  w1: (24, 4)  w2: (36, 24)  w3: (2, 36)  b*: (out, 1)
    x = x_ref[...]

    # affine1 + (eval) dropout + relu
    h1 = jnp.dot(w1_ref[...], x, preferred_element_type=jnp.float32) + b1_ref[...]
    h1 = jnp.maximum(h1, 0.0)

    # affine2 + (eval) dropout + relu
    h2 = jnp.dot(w2_ref[...], h1, preferred_element_type=jnp.float32) + b2_ref[...]
    h2 = jnp.maximum(h2, 0.0)

    # affine3
    logits = jnp.dot(w3_ref[...], h2, preferred_element_type=jnp.float32) + b3_ref[...]

    # 2-class softmax, closed form (numerically safe: exp overflow -> p0 = 0).
    d = logits[1:2, :] - logits[0:1, :]
    p0 = 1.0 / (1.0 + jnp.exp(d))
    p1 = 1.0 - p0
    o_ref[...] = jnp.concatenate([p0, p1], axis=0)  # single lane-dense store


def _round_up(n, m):
    return ((n + m - 1) // m) * m


@partial(jax.jit, static_argnames=("tile_b",))
def policy_forward(x, params, tile_b=TILE_B):
    """x: (B, 4) float32 -> (B, 2) softmax probabilities."""
    w1, b1, w2, b2, w3, b3 = params
    B = x.shape[0]

    # Shrink the tile for tiny batches (min 128 lanes), cap at TILE_B for big ones.
    tile = min(tile_b, max(128, _round_up(B, 128)))
    n_tiles = pl.cdiv(B, tile)
    b_pad = n_tiles * tile

    # Present batch on the lane (last) axis, zero-padded to a tile multiple.
    xt = jnp.zeros((4, b_pad), jnp.float32).at[:, :B].set(x.T)

    # Weights/biases: constant block index across the grid -> stay VMEM-resident.
    const = lambda a: pl.BlockSpec(a.shape, lambda i: (0, 0))

    n_param = 24 * 4 + 24 + 36 * 24 + 36 + 2 * 36 + 2
    cost = pl.CostEstimate(
        flops=2 * b_pad * (4 * 24 + 24 * 36 + 36 * 2),
        transcendentals=b_pad,
        bytes_accessed=4 * (4 * b_pad + 2 * b_pad + n_param),
    )

    out = pl.pallas_call(
        policy_kernel,
        out_shape=jax.ShapeDtypeStruct((2, b_pad), jnp.float32),
        grid=(n_tiles,),
        in_specs=[
            pl.BlockSpec((4, tile), lambda i: (0, i)),
            const(w1), const(b1), const(w2), const(b2), const(w3), const(b3),
        ],
        out_specs=pl.BlockSpec((2, tile), lambda i: (0, i)),
        compiler_params=pltpu.CompilerParams(
            dimension_semantics=("parallel",)),  # shard batch across v7x's 2 TCs
        cost_estimate=cost,
    )(xt, w1, b1, w2, b2, w3, b3)

    return out[:, :B].T  # back to PyTorch's (B, 2)


def init_params(key):
    """nn.Linear-style init (uniform +/- 1/sqrt(fan_in)).

    Weights are kept in PyTorch (out, in) order; biases are (out, 1)."""
    def linear(key, fan_in, fan_out):
        kw, kb = jax.random.split(key)
        bound = 1.0 / jnp.sqrt(fan_in)
        w = jax.random.uniform(kw, (fan_out, fan_in), jnp.float32, -bound, bound)
        b = jax.random.uniform(kb, (fan_out, 1), jnp.float32, -bound, bound)
        return w, b

    k1, k2, k3 = jax.random.split(key, 3)
    w1, b1 = linear(k1, 4, 24)
    w2, b2 = linear(k2, 24, 36)
    w3, b3 = linear(k3, 36, 2)
    return (w1, b1, w2, b2, w3, b3)


if __name__ == "__main__":
    key = jax.random.PRNGKey(0)
    k_params, k_x = jax.random.split(key)

    params = init_params(k_params)
    # CartPole observation: batch of 4-dim state vectors.
    x = jax.random.normal(k_x, (2, 4), jnp.float32)

    probs = policy_forward(x, params)
    probs = jax.block_until_ready(probs)

    # Plain-JAX reference (eval-mode dropout == identity).
    w1, b1, w2, b2, w3, b3 = params
    h1 = jnp.maximum(x @ w1.T + b1.T, 0.0)
    h2 = jnp.maximum(h1 @ w2.T + b2.T, 0.0)
    ref = jax.nn.softmax(h2 @ w3.T + b3.T, axis=1)

    assert probs.shape == (2, 2)
    assert jnp.allclose(probs, ref, atol=1e-5), "mismatch vs reference"
    assert jnp.allclose(jnp.sum(probs, axis=1), 1.0, atol=1e-5)

    print("KERNEL_OK")
</pallas_src>

<mosaic_0001>
module attributes {stable_mosaic.version = 11 : i64} {
  func.func @policy_kernel(%arg0: i32, %arg1: memref<4x128xf32, #tpu.memory_space<vmem>>, %arg2: memref<24x4xf32, #tpu.memory_space<vmem>>, %arg3: memref<24x1xf32, #tpu.memory_space<vmem>>, %arg4: memref<36x24xf32, #tpu.memory_space<vmem>>, %arg5: memref<36x1xf32, #tpu.memory_space<vmem>>, %arg6: memref<2x36xf32, #tpu.memory_space<vmem>>, %arg7: memref<2x1xf32, #tpu.memory_space<vmem>>, %arg8: memref<2x128xf32, #tpu.memory_space<vmem>>) attributes {dimension_semantics = [#tpu.dimension_semantics<parallel>], iteration_bounds = array<i64: 1>, scalar_prefetch = 0 : i64, scratch_operands = 0 : i64, tpu.core_type = #tpu.core_type<tc>, window_params = [{transform_indices = @transform_0, window_bounds = array<i64: 4, 128>}, {pipeline_mode = #tpu.pipeline_mode<synchronous>, transform_indices = @transform_1, window_bounds = array<i64: 24, 4>}, {pipeline_mode = #tpu.pipeline_mode<synchronous>, transform_indices = @transform_2, window_bounds = array<i64: 24, 1>}, {pipeline_mode = #tpu.pipeline_mode<synchronous>, transform_indices = @transform_3, window_bounds = array<i64: 36, 24>}, {pipeline_mode = #tpu.pipeline_mode<synchronous>, transform_indices = @transform_4, window_bounds = array<i64: 36, 1>}, {pipeline_mode = #tpu.pipeline_mode<synchronous>, transform_indices = @transform_5, window_bounds = array<i64: 2, 36>}, {pipeline_mode = #tpu.pipeline_mode<synchronous>, transform_indices = @transform_6, window_bounds = array<i64: 2, 1>}, {transform_indices = @transform_7, window_bounds = array<i64: 2, 128>}]} {
    %c0 = arith.constant 0 : index
    %c0_0 = arith.constant 0 : index
    %0 = vector.load %arg1[%c0, %c0_0] : memref<4x128xf32, #tpu.memory_space<vmem>>, vector<4x128xf32>
    %c0_1 = arith.constant 0 : index
    %c0_2 = arith.constant 0 : index
    %1 = vector.load %arg2[%c0_1, %c0_2] : memref<24x4xf32, #tpu.memory_space<vmem>>, vector<24x4xf32>
    %cst = arith.constant dense<0.000000e+00> : vector<24x128xf32>
    %2 = tpu.matmul %1, %0, %cst {dimension_numbers = #tpu.dot_dimension_numbers<[1], [0], [0], [1], [0, 0, 1, 1], [], []>} : vector<24x4xf32>, vector<4x128xf32>, vector<24x128xf32> -> vector<24x128xf32>
    %c0_3 = arith.constant 0 : index
    %c0_4 = arith.constant 0 : index
    %3 = vector.load %arg3[%c0_3, %c0_4] : memref<24x1xf32, #tpu.memory_space<vmem>>, vector<24x1xf32>
    %4 = vector.broadcast %3 : vector<24x1xf32> to vector<24x128xf32>
    %5 = arith.addf %2, %4 : vector<24x128xf32>
    %cst_5 = arith.constant 0.000000e+00 : f32
    %6 = vector.broadcast %cst_5 : f32 to vector<24x128xf32>
    %7 = arith.maximumf %5, %6 : vector<24x128xf32>
    %c0_6 = arith.constant 0 : index
    %c0_7 = arith.constant 0 : index
    %8 = vector.load %arg4[%c0_6, %c0_7] : memref<36x24xf32, #tpu.memory_space<vmem>>, vector<36x24xf32>
    %cst_8 = arith.constant dense<0.000000e+00> : vector<36x128xf32>
    %9 = tpu.matmul %8, %7, %cst_8 {dimension_numbers = #tpu.dot_dimension_numbers<[1], [0], [0], [1], [0, 0, 1, 1], [], []>} : vector<36x24xf32>, vector<24x128xf32>, vector<36x128xf32> -> vector<36x128xf32>
    %c0_9 = arith.constant 0 : index
    %c0_10 = arith.constant 0 : index
    %10 = vector.load %arg5[%c0_9, %c0_10] : memref<36x1xf32, #tpu.memory_space<vmem>>, vector<36x1xf32>
    %11 = vector.broadcast %10 : vector<36x1xf32> to vector<36x128xf32>
    %12 = arith.addf %9, %11 : vector<36x128xf32>
    %cst_11 = arith.constant 0.000000e+00 : f32
    %13 = vector.broadcast %cst_11 : f32 to vector<36x128xf32>
    %14 = arith.maximumf %12, %13 : vector<36x128xf32>
    %c0_12 = arith.constant 0 : index
    %c0_13 = arith.constant 0 : index
    %15 = vector.load %arg6[%c0_12, %c0_13] : memref<2x36xf32, #tpu.memory_space<vmem>>, vector<2x36xf32>
    %cst_14 = arith.constant dense<0.000000e+00> : vector<2x128xf32>
    %16 = tpu.matmul %15, %14, %cst_14 {dimension_numbers = #tpu.dot_dimension_numbers<[1], [0], [0], [1], [0, 0, 1, 1], [], []>} : vector<2x36xf32>, vector<36x128xf32>, vector<2x128xf32> -> vector<2x128xf32>
    %c0_15 = arith.constant 0 : index
    %c0_16 = arith.constant 0 : index
    %17 = vector.load %arg7[%c0_15, %c0_16] : memref<2x1xf32, #tpu.memory_space<vmem>>, vector<2x1xf32>
    %18 = vector.broadcast %17 : vector<2x1xf32> to vector<2x128xf32>
    %19 = arith.addf %16, %18 : vector<2x128xf32>
    %20 = vector.extract_strided_slice %19 {offsets = [1, 0], sizes = [1, 128], strides = [1, 1]} : vector<2x128xf32> to vector<1x128xf32>
    %21 = vector.extract_strided_slice %19 {offsets = [0, 0], sizes = [1, 128], strides = [1, 1]} : vector<2x128xf32> to vector<1x128xf32>
    %22 = arith.subf %20, %21 : vector<1x128xf32>
    %23 = math.exp %22 : vector<1x128xf32>
    %cst_17 = arith.constant 1.000000e+00 : f32
    %24 = vector.broadcast %cst_17 : f32 to vector<1x128xf32>
    %25 = arith.addf %24, %23 : vector<1x128xf32>
    %cst_18 = arith.constant 1.000000e+00 : f32
    %26 = vector.broadcast %cst_18 : f32 to vector<1x128xf32>
    %27 = arith.divf %26, %25 : vector<1x128xf32>
    %cst_19 = arith.constant 1.000000e+00 : f32
    %28 = vector.broadcast %cst_19 : f32 to vector<1x128xf32>
    %29 = arith.subf %28, %27 : vector<1x128xf32>
    %30 = tpu.concatenate %27, %29 in 0 : vector<1x128xf32>, vector<1x128xf32> -> vector<2x128xf32>
    %c0_20 = arith.constant 0 : index
    %c0_21 = arith.constant 0 : index
    %31 = vector.load %arg8[%c0_20, %c0_21] : memref<2x128xf32, #tpu.memory_space<vmem>>, vector<2x128xf32>
    tpu.vector_store %arg8[%c0_20, %c0_21], %30 {strides = array<i32>} : memref<2x128xf32, #tpu.memory_space<vmem>>, vector<2x128xf32>,
    return
  }
  func.func @transform_0(%arg0: i32) -> (i32, i32) {
    %c0_i32 = arith.constant 0 : i32
    %c0_i32_0 = arith.constant 0 : i32
    return %c0_i32, %arg0 : i32, i32
  }
  func.func @transform_1(%arg0: i32) -> (i32, i32) {
    %c0_i32 = arith.constant 0 : i32
    %c0_i32_0 = arith.constant 0 : i32
    %c0_i32_1 = arith.constant 0 : i32
    return %c0_i32, %c0_i32_0 : i32, i32
  }
  func.func @transform_2(%arg0: i32) -> (i32, i32) {
    %c0_i32 = arith.constant 0 : i32
    %c0_i32_0 = arith.constant 0 : i32
    %c0_i32_1 = arith.constant 0 : i32
    return %c0_i32, %c0_i32_0 : i32, i32
  }
  func.func @transform_3(%arg0: i32) -> (i32, i32) {
    %c0_i32 = arith.constant 0 : i32
    %c0_i32_0 = arith.constant 0 : i32
    %c0_i32_1 = arith.constant 0 : i32
    return %c0_i32, %c0_i32_0 : i32, i32
  }
  func.func @transform_4(%arg0: i32) -> (i32, i32) {
    %c0_i32 = arith.constant 0 : i32
    %c0_i32_0 = arith.constant 0 : i32
    %c0_i32_1 = arith.constant 0 : i32
    return %c0_i32, %c0_i32_0 : i32, i32
  }
  func.func @transform_5(%arg0: i32) -> (i32, i32) {
    %c0_i32 = arith.constant 0 : i32
    %c0_i32_0 = arith.constant 0 : i32
    %c0_i32_1 = arith.constant 0 : i32
    return %c0_i32, %c0_i32_0 : i32, i32
  }
  func.func @transform_6(%arg0: i32) -> (i32, i32) {
    %c0_i32 = arith.constant 0 : i32
    %c0_i32_0 = arith.constant 0 : i32
    %c0_i32_1 = arith.constant 0 : i32
    return %c0_i32, %c0_i32_0 : i32, i32
  }
  func.func @transform_7(%arg0: i32) -> (i32, i32) {
    %c0_i32 = arith.constant 0 : i32
    %c0_i32_0 = arith.constant 0 : i32
    return %c0_i32, %arg0 : i32, i32
  }
}

</mosaic_0001>

<llo_original>
// kernel: policy_forward.1
$region0: #{policy_forward.1}
  #allocation0 [shape = 'u32[]', space=smem, size = 0x4, offset = 0x4, fixed_abs, tag = 'smem constant byte address 0x4 - core index']
  #allocation1 [shape = 'u32[72,128]{1,0:T(1,128)}', space=vmem, size = 0x9000, scoped, tag = 'internal scratch']
  %s0 = inlined_call_operand.vmem [shape: f32[4,128], index: 0, kind: input, shape index: {}]
  %s1 = inlined_call_operand.vmem [shape: f32[24,4], index: 1, kind: input, shape index: {}]
  %s2 = inlined_call_operand.vmem [shape: f32[24,1], index: 2, kind: input, shape index: {}]
  %s3 = inlined_call_operand.vmem [shape: f32[36,24], index: 3, kind: input, shape index: {}]
  %s4 = inlined_call_operand.vmem [shape: f32[36,1], index: 4, kind: input, shape index: {}]
  %s5 = inlined_call_operand.vmem [shape: f32[2,36], index: 5, kind: input, shape index: {}]
  %s6 = inlined_call_operand.vmem [shape: f32[2,1], index: 6, kind: input, shape index: {}]
  %s7 = inlined_call_operand.vmem [shape: f32[2,128], index: 7, kind: output, shape index: {}]
  %s8 = sld [smem:[#allocation0]]
  $region38: #{policy_forward.1} parent=0
    _
  %s10 = ssub.s32 1, %s8
  %s11 = scalar_select 0, %s10, %s8
  // Predicated region
  $region2: #{policy_forward.1} parent=0 // pred_check
    _
  $region3: #{policy_forward.1} parent=0 // pred_check_branch
    %13 = sbr.rel (0) target = $region5
  $region4: #{policy_forward.1} parent=0 // pred_region
    _
  $region5: #{policy_forward.1} parent=0 // pred_fallthru
    _
  // Predicated region
  $region6: #{policy_forward.1} parent=0 // pred_check
    _
  $region7: #{policy_forward.1} parent=0 // pred_check_branch
    %15 = sbr.rel (0) target = $region9
  $region8: #{policy_forward.1} parent=0 // pred_region
    _
  $region9: #{policy_forward.1} parent=0 // pred_fallthru
    _
  // Predicated region
  $region10: #{policy_forward.1} parent=0 // pred_check
    _
  $region11: #{policy_forward.1} parent=0 // pred_check_branch
    %17 = sbr.rel (0) target = $region13
  $region12: #{policy_forward.1} parent=0 // pred_region
    _
  $region13: #{policy_forward.1} parent=0 // pred_fallthru
    _
  // Predicated region
  $region14: #{policy_forward.1} parent=0 // pred_check
    _
  $region15: #{policy_forward.1} parent=0 // pred_check_branch
    %19 = sbr.rel (0) target = $region17
  $region16: #{policy_forward.1} parent=0 // pred_region
    _
  $region17: #{policy_forward.1} parent=0 // pred_fallthru
    _
  // Predicated region
  $region18: #{policy_forward.1} parent=0 // pred_check
    _
  $region19: #{policy_forward.1} parent=0 // pred_check_branch
    %21 = sbr.rel (0) target = $region21
  $region20: #{policy_forward.1} parent=0 // pred_region
    _
  $region21: #{policy_forward.1} parent=0 // pred_fallthru
    _
  // Predicated region
  $region22: #{policy_forward.1} parent=0 // pred_check
    _
  $region23: #{policy_forward.1} parent=0 // pred_check_branch
    %23 = sbr.rel (0) target = $region25
  $region24: #{policy_forward.1} parent=0 // pred_region
    _
  $region25: #{policy_forward.1} parent=0 // pred_fallthru
    _
  // Predicated region
  $region26: #{policy_forward.1} parent=0 // pred_check
    _
  $region27: #{policy_forward.1} parent=0 // pred_check_branch
    %25 = sbr.rel (0) target = $region29
  $region28: #{policy_forward.1} parent=0 // pred_region
    _
  $region29: #{policy_forward.1} parent=0 // pred_fallthru
    _
  %v26 = vld [vmem:[%s0] sm:$0xf]
  %v27 = vld [vmem:[%s1] sm:$0xff]
  %v28 = vld [vmem:[%s1 + $0x8] sm:$0xff]
  %v29 = vld [vmem:[%s1 + $0x10] sm:$0xff]
  %v30 = vld [vmem:[%s2] sm:$0xff]
  %v31 = vld [vmem:[%s2 + $0x8] sm:$0xff]
  %v32 = vld [vmem:[%s2 + $0x10] sm:$0xff]
  %34 = vset.pattern.permute.xlu0 0
  %35 = vperm.xlu0 %34, %v30
  %v36 = vpop.permute.xlu0 %35
  %39 = vset.pattern.permute.xlu0 0
  %40 = vperm.xlu0 %39, %v31
  %v41 = vpop.permute.xlu0 %40
  %44 = vset.pattern.permute.xlu0 0
  %45 = vperm.xlu0 %44, %v32
  %v46 = vpop.permute.xlu0 %45
  %vm48 = vcmask 31744
  %v50 = vsel %vm48, %v27, 0
  %v53 = vsel %vm48, %v28, 0
  %v56 = vsel %vm48, %v29, 0
  %vm58 = vcmask 1043456
  %v60 = vsel %vm58, %v26, 0
  %62 = vmatpush.msra.mxu0 0.0
  %63 = vmatpush.msra.mxu0 0.0
  %64 = vmatpush.msra.mxu0 0.0
  %65 = vmatpush.msra.mxu0 0.0
  %66 = vmatpush.msra.mxu0 0.0
  %67 = vmatpush.msra.mxu0 0.0
  %68 = vmatpush.msra.mxu0 0.0
  %69 = vmatpush.msra.mxu0 0.0
  %70 = vmatpush.msra.mxu0 0.0
  %71 = vmatpush.msra.mxu0 0.0
  %72 = vmatpush.msra.mxu0 0.0
  %73 = vmatpush.msra.mxu0 0.0
  %74 = vmatpush.msra.mxu0 0.0
  %75 = vmatpush.msra.mxu0 0.0
  %76 = vmatpush.msra.mxu0 0.0
  %77 = vmatpush.msra.mxu0 %v60
  %78 = vmatmul.f32.gmra.mxu0 %v50
  %v79 = vpop.f32.mrf.mxu0
  %v80 = vadd.f32 %v36, %v79
  %81 = vmatmul.f32.gmra.mxu0 %v53
  %v82 = vpop.f32.mrf.mxu0
  %v83 = vadd.f32 %v41, %v82
  %84 = vmatmul.f32.gmra.mxu0 %v56
  %v85 = vpop.f32.mrf.mxu0
  %v86 = vadd.f32 %v46, %v85
  %87 = vdwg.mxu0
  %v88 = vmax.f32 %v80, 0.0
  %v89 = vmax.f32 %v83, 0.0
  %v90 = vmax.f32 %v86, 0.0
  %v91 = vld [vmem:[%s3] sm:$0xff]
  %v92 = vld [vmem:[%s3 + $0x8] sm:$0xff]
  %v93 = vld [vmem:[%s3 + $0x10] sm:$0xff]
  %v94 = vld [vmem:[%s3 + $0x18] sm:$0xff]
  %v95 = vld [vmem:[%s3 + $0x20] sm:$0xf]
  %v96 = vld [vmem:[%s4] sm:$0xff]
  %v97 = vld [vmem:[%s4 + $0x8] sm:$0xff]
  %v98 = vld [vmem:[%s4 + $0x10] sm:$0xff]
  %v99 = vld [vmem:[%s4 + $0x18] sm:$0xff]
  %v100 = vld [vmem:[%s4 + $0x20] sm:$0xf]
  %102 = vset.pattern.permute.xlu0 0
  %103 = vperm.xlu0 %102, %v96
  %v104 = vpop.permute.xlu0 %103
  %107 = vset.pattern.permute.xlu0 0
  %108 = vperm.xlu0 %107, %v97
  %v109 = vpop.permute.xlu0 %108
  %112 = vset.pattern.permute.xlu0 0
  %113 = vperm.xlu0 %112, %v98
  %v114 = vpop.permute.xlu0 %113
  %117 = vset.pattern.permute.xlu0 0
  %118 = vperm.xlu0 %117, %v99
  %v119 = vpop.permute.xlu0 %118
  %122 = vset.pattern.permute.xlu0 0
  %123 = vperm.xlu0 %122, %v100
  %v124 = vpop.permute.xlu0 %123
  %vm126 = vcmask 195584
  %v128 = vsel %vm126, %v91, 0
  %v131 = vsel %vm126, %v92, 0
  %v134 = vsel %vm126, %v93, 0
  %v137 = vsel %vm126, %v94, 0
  %v140 = vsel %vm126, %v95, 0
  %142 = vmatpush.msra.mxu0 0.0
  %143 = vmatpush.msra.mxu0 0.0
  %144 = vmatpush.msra.mxu0 0.0
  %145 = vmatpush.msra.mxu0 0.0
  %146 = vmatpush.msra.mxu0 0.0
  %147 = vmatpush.msra.mxu0 0.0
  %148 = vmatpush.msra.mxu0 0.0
  %149 = vmatpush.msra.mxu0 0.0
  %150 = vmatpush.msra.mxu0 0.0
  %151 = vmatpush.msra.mxu0 0.0
  %152 = vmatpush.msra.mxu0 0.0
  %153 = vmatpush.msra.mxu0 0.0
  %154 = vmatpush.msra.mxu0 0.0
  %155 = vmatpush.msra.mxu0 %v90
  %156 = vmatpush.msra.mxu0 %v89
  %157 = vmatpush.msra.mxu0 %v88
  %158 = vmatmul.f32.gmra.mxu0 %v128
  %v159 = vpop.f32.mrf.mxu0
  %v160 = vadd.f32 %v104, %v159
  %161 = vmatmul.f32.gmra.mxu0 %v131
  %v162 = vpop.f32.mrf.mxu0
  %v163 = vadd.f32 %v109, %v162
  %164 = vmatmul.f32.gmra.mxu0 %v134
  %v165 = vpop.f32.mrf.mxu0
  %v166 = vadd.f32 %v114, %v165
  %167 = vmatmul.f32.gmra.mxu0 %v137
  %v168 = vpop.f32.mrf.mxu0
  %v169 = vadd.f32 %v119, %v168
  %170 = vmatmul.f32.gmra.mxu0 %v140
  %v171 = vpop.f32.mrf.mxu0
  %v172 = vadd.f32 %v124, %v171
  %173 = vdwg.mxu0
  %v174 = vmax.f32 %v160, 0.0
  %v175 = vmax.f32 %v163, 0.0
  %v176 = vmax.f32 %v166, 0.0
  %v177 = vmax.f32 %v169, 0.0
  %v178 = vmax.f32 %v172, 0.0
  %v179 = vld [vmem:[%s5] sm:$0x3]
  %v180 = vld [vmem:[%s6] sm:$0x3]
  %182 = vset.pattern.permute.xlu0 0
  %183 = vperm.xlu0 %182, %v180
  %v184 = vpop.permute.xlu0 %183
  %vm186 = vcmask 293888
  %v188 = vsel %vm186, %v179, 0
  %v191 = vsel %vm58, %v178, 0
  %193 = vmatpush.msra.mxu0 0.0
  %194 = vmatpush.msra.mxu0 0.0
  %195 = vmatpush.msra.mxu0 0.0
  %196 = vmatpush.msra.mxu0 0.0
  %197 = vmatpush.msra.mxu0 0.0
  %198 = vmatpush.msra.mxu0 0.0
  %199 = vmatpush.msra.mxu0 0.0
  %200 = vmatpush.msra.mxu0 0.0
  %201 = vmatpush.msra.mxu0 0.0
  %202 = vmatpush.msra.mxu0 0.0
  %203 = vmatpush.msra.mxu0 0.0
  %204 = vmatpush.msra.mxu0 %v191
  %205 = vmatpush.msra.mxu0 %v177
  %206 = vmatpush.msra.mxu0 %v176
  %207 = vmatpush.msra.mxu0 %v175
  %208 = vmatpush.msra.mxu0 %v174
  %209 = vmatmul.f32.gmra.mxu0 %v188
  %v210 = vpop.f32.mrf.mxu0
  %v211 = vadd.f32 %v184, %v210
  %212 = vdwg.mxu0
  %v214 = vrot.slane %v211, 7
  %v216 = vsub.f32 %v211, %v214
  %v217 = vmul.f32 %v216, 1.442695
  %v218 = vpow.pop %v217
  %v219 = vadd.f32 %v218, 1.0
  %v220 = vrcp.pop %v219
  %v221 = vmul.f32 %v219, %v220
  %v222 = vsub.f32 1.0, %v221
  %v223 = vmul.f32 %v220, %v222
  %v224 = vadd.f32 %v220, %v223
  %vm225 = vweird.f32 %v219
  %vm226 = vweird.f32 %v220
  %vm227 = vmor %vm225, %vm226
  %v228 = vsel %vm227, %v220, %v224
  %v229 = vand.u32 2147483647, %v219
  %vm230 = vcmp.eq.f32.partialorder %v229, 8.507059e+37
  %v231 = vand.u32 %v219, 2147483648
  %v232 = vor.u32 1.1754944e-38, %v231
  %v233 = vsel %vm230, %v232, %v228
  %v234 = vmul.f32 1.0, %v233
  %v235 = vsub.f32 1.0, %v234
  %v237 = vrot.slane %v234, 1
  %vm239 = vcmask 1040384
  %v240 = vsel %vm239, %v237, %v235
  %241 = vst [vmem:[%s7] sm:$0x3] %v240
  // Predicated region
  $region30: #{policy_forward.1} parent=0 // pred_check
    _
  $region31: #{policy_forward.1} parent=0 // pred_check_branch
    %243 = sbr.rel (0) target = $region33
  $region32: #{policy_forward.1} parent=0 // pred_region
    _
  $region33: #{policy_forward.1} parent=0 // pred_fallthru
    _
  // Predicated region
  $region34: #{policy_forward.1} parent=0 // pred_check
    _
  $region35: #{policy_forward.1} parent=0 // pred_check_branch
    %245 = sbr.rel (0) target = $region37
  $region36: #{policy_forward.1} parent=0 // pred_region
    _
  $region37: #{policy_forward.1} parent=0 // pred_fallthru
    _

</llo_original>
